<compile_context>
chip_gen: v6e
topology: v6e:2x2x1
jax: 0.10.0
libtpu: 0.0.40
codegen_flags: <defaults>
</compile_context>

<pallas_src>
from types import SimpleNamespace

import jax
import jax.numpy as jnp
from jax.experimental import pallas as pl
from jax.experimental.pallas import tpu as pltpu

_LANE = 128
_SUBLANE = 8


# ----------------------------- parameter setup -----------------------------

def hidden_dims(current_dim, decoder_layer_num):
    """Replicates the dim progression from Decoder.__init__."""
    dims = []
    for _ in range(decoder_layer_num - 1):
        current_dim = int(current_dim * 1.5 // 2 * 2)
        dims.append(current_dim)
    return dims


def init_params(args, key):
    """Deterministic synthetic parameters (not a checkpoint load)."""
    current_dim = args.latent_dim + args.style_dim
    dims = hidden_dims(current_dim, args.decoder_layer_num)

    params = {"hidden": []}
    d_in = current_dim
    for d_out in dims:
        key, kw, kb = jax.random.split(key, 3)
        w = jax.random.normal(kw, (d_in, d_out), jnp.float32) * 0.05
        b = jax.random.normal(kb, (d_out,), jnp.float32) * 0.05
        params["hidden"].append((w, b))
        d_in = d_out

    key, k1, k2, k3, k4 = jax.random.split(key, 5)
    params["we"] = jax.random.normal(k1, (d_in, 64 - 18), jnp.float32) * 0.05  # expression head
    params["be"] = jax.random.normal(k2, (64 - 18,), jnp.float32) * 0.05
    params["wm"] = jax.random.normal(k3, (d_in, 18), jnp.float32) * 0.05       # mouth head
    params["bm"] = jax.random.normal(k4, (18,), jnp.float32) * 0.05
    return params


def _round_up(x, m):
    return ((x + m - 1) // m) * m


def pack_params(params, latent_dim, compute_dtype=jnp.bfloat16, lane_pad=True):
    """One-time packing (NOT in the per-call path):
       * fused [mouth|expr] head (column order matches torch.cat((mouth, expr), dim=2)),
       * optional exact lane-padding of hidden widths to multiples of 128 (zero cols/rows),
       * split of the first matmul weight into latent/style halves (in-kernel concat),
       * cast of all weights to the MXU compute dtype; biases kept as (1, N) f32."""
    hidden = params["hidden"]
    n_hidden = len(hidden)

    w_head = jnp.concatenate([params["wm"], params["we"]], axis=1)   # [mouth | expr]
    b_head = jnp.concatenate([params["bm"], params["be"]], axis=0)

    layers = list(hidden) + [(w_head, b_head)]                       # matmul layers in order

    if lane_pad and n_hidden > 0:
        padded, prev_pad = [], 0
        for li, (w, b) in enumerate(layers):
            d_in, d_out = w.shape
            is_head = (li == n_hidden)
            d_out_p = d_out if is_head else _round_up(d_out, _LANE)
            w_p = jnp.zeros((d_in + prev_pad, d_out_p), w.dtype).at[:d_in, :d_out].set(w)
            b_p = jnp.zeros((d_out_p,), b.dtype).at[:d_out].set(b)
            padded.append((w_p, b_p))
            prev_pad = d_out_p - d_out
        layers = padded

    w0, b0 = layers[0]
    packed = {
        "n_hidden": n_hidden,
        "compute_dtype": compute_dtype,
        "out_dim": w_head.shape[1],
        "wl0": w0[:latent_dim].astype(compute_dtype),
        "ws0": w0[latent_dim:].astype(compute_dtype),
        "b0": b0.reshape(1, -1).astype(jnp.float32),
        "rest": [(w.astype(compute_dtype), b.reshape(1, -1).astype(jnp.float32))
                 for (w, b) in layers[1:]],
    }
    return packed


# ------------------------------- Pallas kernel ------------------------------

def make_decoder_kernel(n_hidden, compute_dtype):
    """Kernel refs: latent, style, wl0, ws0, b0, (w,b)*(n_hidden-1), w_head, b_head, out.
       Matmuls in compute_dtype on the MXU with f32 accumulation; bias/ReLU in f32."""

    def kernel(*refs):
        latent_ref, style_ref = refs[0], refs[1]
        out_ref = refs[-1]

        lat = latent_ref[...].astype(compute_dtype)          # (t_tile, L)
        sty = style_ref[...].astype(compute_dtype)           # (1, S) -> broadcast over rows

        idx = 2
        wl, ws, b = refs[idx][...], refs[idx + 1][...], refs[idx + 2][...]
        idx += 3
        # In-kernel "concat": x @ W == latent @ W_l + style @ W_s
        a = (jnp.dot(lat, wl, preferred_element_type=jnp.float32)
             + jnp.dot(sty, ws, preferred_element_type=jnp.float32)
             + b)

        if n_hidden > 0:
            a = jnp.maximum(a, 0.0)                           # f32 ReLU (v5e-safe)
            h = a.astype(compute_dtype)
            for _ in range(n_hidden - 1):
                w, b2 = refs[idx][...], refs[idx + 1][...]
                idx += 2
                a = jnp.dot(h, w, preferred_element_type=jnp.float32) + b2
                a = jnp.maximum(a, 0.0)
                h = a.astype(compute_dtype)
            w_head, b_head = refs[idx][...], refs[idx + 1][...]
            a = jnp.dot(h, w_head, preferred_element_type=jnp.float32) + b_head

        out_ref[...] = a.astype(out_ref.dtype)                # 64 real columns, no pad

    return kernel


# --------------------------------- wrapper ----------------------------------

def decoder_forward(latent_code, target_style, packed, t_tile_cap=2048):
    """latent_code: [B, T, latent_dim], target_style: [B, style_dim] -> [B, T, 64]."""
    B, T, L = latent_code.shape
    S = target_style.shape[-1]
    compute_dtype = packed["compute_dtype"]
    n_hidden = packed["n_hidden"]
    out_dim = packed["out_dim"]

    # Adaptive T tiling: big tiles (amortize per-step overhead) but keep >= 2 grid steps
    # for megacore when the input is large enough to benefit.
    if T > t_tile_cap:
        n_t = pl.cdiv(T, t_tile_cap)
    elif B < 2 and T >= 2 * _SUBLANE:
        n_t = 2
    else:
        n_t = 1
    t_tile = T if n_t == 1 else _round_up(pl.cdiv(T, n_t), _SUBLANE)
    T_pad = _round_up(T, t_tile)

    lat = latent_code
    if T_pad != T:
        lat = jnp.pad(lat, ((0, 0), (0, T_pad - T), (0, 0)))
    style3 = target_style.reshape(B, 1, S)                    # free metadata reshape

    flat = [packed["wl0"], packed["ws0"], packed["b0"]]
    for w, b in packed["rest"]:
        flat += [w, b]

    in_specs = [
        pl.BlockSpec((None, t_tile, L), lambda b, t: (b, t, 0)),   # latent tile
        pl.BlockSpec((None, 1, S), lambda b, t: (b, 0, 0)),        # per-batch style row
    ]
    for p in flat:
        # tiny weights/biases: whole array resident in VMEM, same block every step
        in_specs.append(pl.BlockSpec(p.shape, lambda b, t: (0, 0)))

    out = pl.pallas_call(
        make_decoder_kernel(n_hidden, compute_dtype),
        out_shape=jax.ShapeDtypeStruct((B, T_pad, out_dim), latent_code.dtype),
        grid=(B, T_pad // t_tile),
        in_specs=in_specs,
        out_specs=pl.BlockSpec((None, t_tile, out_dim), lambda b, t: (b, t, 0)),
        compiler_params=pltpu.CompilerParams(
            dimension_semantics=("parallel", "parallel")),
    )(lat, style3, *flat)

    if T_pad != T:
        out = out[:, :T, :]
    return out


# ------------------------------ pure-JAX reference --------------------------

def decoder_ref(latent_code, target_style, params):
    B, T, _ = latent_code.shape
    S = target_style.shape[-1]
    style_rep = jnp.broadcast_to(target_style[:, None, :], (B, T, S))
    h = jnp.concatenate([latent_code, style_rep], axis=-1)
    for w, b in params["hidden"]:
        h = jax.nn.relu(h @ w + b)
    expr = h @ params["we"] + params["be"]
    mouth = h @ params["wm"] + params["bm"]
    return jnp.concatenate([mouth, expr], axis=-1)


# ----------------------------------- main ------------------------------------

if __name__ == "__main__":
    # TODO(synk): the optional source_style branch is just a second pass of the same
    # network; call decoder_forward twice with different styles if it is needed.
    args = SimpleNamespace(latent_dim=32, style_dim=32, decoder_layer_num=3)

    key = jax.random.PRNGKey(0)
    key, k_params, k_latent, k_style = jax.random.split(key, 4)
    params = init_params(args, k_params)

    B, T = 2, 8
    latent_code = jax.random.normal(k_latent, (B, T, args.latent_dim), jnp.float32)
    target_style = jax.random.normal(k_style, (B, args.style_dim), jnp.float32)

    ref = decoder_ref(latent_code, target_style, params)

    # Fast path: bf16 matmul inputs, f32 accumulation (looser tolerance vs f32 ref).
    packed_bf16 = pack_params(params, args.latent_dim, jnp.bfloat16)
    out = jax.block_until_ready(decoder_forward(latent_code, target_style, packed_bf16))
    assert out.shape == (B, T, 64), out.shape
    assert jnp.allclose(out, ref, atol=5e-2, rtol=5e-2), "bf16 kernel mismatch vs reference"

    # Exact path: full f32 to verify semantics tightly.
    packed_f32 = pack_params(params, args.latent_dim, jnp.float32)
    out_f32 = jax.block_until_ready(decoder_forward(latent_code, target_style, packed_f32))
    assert jnp.allclose(out_f32, ref, atol=1e-4, rtol=1e-4), "f32 kernel mismatch vs reference"

    # Larger case: exercises multi-tile grid, T padding and the row-slice cleanup.
    key, k_lat2, k_sty2 = jax.random.split(key, 3)
    B2, T2 = 1, 2500
    lat2 = jax.random.normal(k_lat2, (B2, T2, args.latent_dim), jnp.float32)
    sty2 = jax.random.normal(k_sty2, (B2, args.style_dim), jnp.float32)
    ref2 = decoder_ref(lat2, sty2, params)
    out2 = jax.block_until_ready(decoder_forward(lat2, sty2, packed_f32))
    assert out2.shape == (B2, T2, 64), out2.shape
    assert jnp.allclose(out2, ref2, atol=1e-4, rtol=1e-4), "tiled f32 kernel mismatch"

    print("KERNEL_OK")
</pallas_src>

<mosaic_0001>
module attributes {stable_mosaic.version = 11 : i64} {
  func.func @kernel(%arg0: i32, %arg1: i32, %arg2: memref<1x8x32xf32, #tpu.memory_space<vmem>>, %arg3: memref<1x1x32xf32, #tpu.memory_space<vmem>>, %arg4: memref<32x128xbf16, #tpu.memory_space<vmem>>, %arg5: memref<32x128xbf16, #tpu.memory_space<vmem>>, %arg6: memref<1x128xf32, #tpu.memory_space<vmem>>, %arg7: memref<128x256xbf16, #tpu.memory_space<vmem>>, %arg8: memref<1x256xf32, #tpu.memory_space<vmem>>, %arg9: memref<256x64xbf16, #tpu.memory_space<vmem>>, %arg10: memref<1x64xf32, #tpu.memory_space<vmem>>, %arg11: memref<1x8x64xf32, #tpu.memory_space<vmem>>) attributes {dimension_semantics = [#tpu.dimension_semantics<parallel>, #tpu.dimension_semantics<parallel>], iteration_bounds = array<i64: 2, 1>, scalar_prefetch = 0 : i64, scratch_operands = 0 : i64, tpu.core_type = #tpu.core_type<tc>, window_params = [{transform_indices = @transform_0, window_bounds = array<i64: 1, 8, 32>}, {transform_indices = @transform_1, window_bounds = array<i64: 1, 1, 32>}, {pipeline_mode = #tpu.pipeline_mode<synchronous>, transform_indices = @transform_2, window_bounds = array<i64: 32, 128>}, {pipeline_mode = #tpu.pipeline_mode<synchronous>, transform_indices = @transform_3, window_bounds = array<i64: 32, 128>}, {pipeline_mode = #tpu.pipeline_mode<synchronous>, transform_indices = @transform_4, window_bounds = array<i64: 1, 128>}, {pipeline_mode = #tpu.pipeline_mode<synchronous>, transform_indices = @transform_5, window_bounds = array<i64: 128, 256>}, {pipeline_mode = #tpu.pipeline_mode<synchronous>, transform_indices = @transform_6, window_bounds = array<i64: 1, 256>}, {pipeline_mode = #tpu.pipeline_mode<synchronous>, transform_indices = @transform_7, window_bounds = array<i64: 256, 64>}, {pipeline_mode = #tpu.pipeline_mode<synchronous>, transform_indices = @transform_8, window_bounds = array<i64: 1, 64>}, {transform_indices = @transform_9, window_bounds = array<i64: 1, 8, 64>}]} {
    %c0 = arith.constant 0 : index
    %c0_0 = arith.constant 0 : index
    %c0_1 = arith.constant 0 : index
    %0 = vector.load %arg2[%c0, %c0_0, %c0_1] : memref<1x8x32xf32, #tpu.memory_space<vmem>>, vector<1x8x32xf32>
    %1 = vector.shape_cast %0 : vector<1x8x32xf32> to vector<8x32xf32>
    %2 = arith.truncf %1 : vector<8x32xf32> to vector<8x32xbf16>
    %c0_2 = arith.constant 0 : index
    %c0_3 = arith.constant 0 : index
    %c0_4 = arith.constant 0 : index
    %3 = vector.load %arg3[%c0_2, %c0_3, %c0_4] : memref<1x1x32xf32, #tpu.memory_space<vmem>>, vector<1x1x32xf32>
    %4 = vector.shape_cast %3 : vector<1x1x32xf32> to vector<1x32xf32>
    %5 = arith.truncf %4 : vector<1x32xf32> to vector<1x32xbf16>
    %c0_5 = arith.constant 0 : index
    %c0_6 = arith.constant 0 : index
    %6 = vector.load %arg4[%c0_5, %c0_6] : memref<32x128xbf16, #tpu.memory_space<vmem>>, vector<32x128xbf16>
    %c0_7 = arith.constant 0 : index
    %c0_8 = arith.constant 0 : index
    %7 = vector.load %arg5[%c0_7, %c0_8] : memref<32x128xbf16, #tpu.memory_space<vmem>>, vector<32x128xbf16>
    %c0_9 = arith.constant 0 : index
    %c0_10 = arith.constant 0 : index
    %8 = vector.load %arg6[%c0_9, %c0_10] : memref<1x128xf32, #tpu.memory_space<vmem>>, vector<1x128xf32>
    %cst = arith.constant dense<0.000000e+00> : vector<8x128xf32>
    %9 = tpu.matmul %2, %6, %cst {dimension_numbers = #tpu.dot_dimension_numbers<[1], [0], [0], [1], [0, 0, 1, 1], [], []>} : vector<8x32xbf16>, vector<32x128xbf16>, vector<8x128xf32> -> vector<8x128xf32>
    %cst_11 = arith.constant dense<0.000000e+00> : vector<1x128xf32>
    %10 = tpu.matmul %5, %7, %cst_11 {dimension_numbers = #tpu.dot_dimension_numbers<[1], [0], [0], [1], [0, 0, 1, 1], [], []>} : vector<1x32xbf16>, vector<32x128xbf16>, vector<1x128xf32> -> vector<1x128xf32>
    %11 = vector.broadcast %10 : vector<1x128xf32> to vector<8x128xf32>
    %12 = arith.addf %9, %11 : vector<8x128xf32>
    %13 = vector.broadcast %8 : vector<1x128xf32> to vector<8x128xf32>
    %14 = arith.addf %12, %13 : vector<8x128xf32>
    %cst_12 = arith.constant 0.000000e+00 : f32
    %15 = vector.broadcast %cst_12 : f32 to vector<8x128xf32>
    %16 = arith.maximumf %14, %15 : vector<8x128xf32>
    %17 = arith.truncf %16 : vector<8x128xf32> to vector<8x128xbf16>
    %c0_13 = arith.constant 0 : index
    %c0_14 = arith.constant 0 : index
    %18 = vector.load %arg7[%c0_13, %c0_14] : memref<128x256xbf16, #tpu.memory_space<vmem>>, vector<128x256xbf16>
    %c0_15 = arith.constant 0 : index
    %c0_16 = arith.constant 0 : index
    %19 = vector.load %arg8[%c0_15, %c0_16] : memref<1x256xf32, #tpu.memory_space<vmem>>, vector<1x256xf32>
    %cst_17 = arith.constant dense<0.000000e+00> : vector<8x256xf32>
    %20 = tpu.matmul %17, %18, %cst_17 {dimension_numbers = #tpu.dot_dimension_numbers<[1], [0], [0], [1], [0, 0, 1, 1], [], []>} : vector<8x128xbf16>, vector<128x256xbf16>, vector<8x256xf32> -> vector<8x256xf32>
    %21 = vector.broadcast %19 : vector<1x256xf32> to vector<8x256xf32>
    %22 = arith.addf %20, %21 : vector<8x256xf32>
    %cst_18 = arith.constant 0.000000e+00 : f32
    %23 = vector.broadcast %cst_18 : f32 to vector<8x256xf32>
    %24 = arith.maximumf %22, %23 : vector<8x256xf32>
    %25 = arith.truncf %24 : vector<8x256xf32> to vector<8x256xbf16>
    %c0_19 = arith.constant 0 : index
    %c0_20 = arith.constant 0 : index
    %26 = vector.load %arg9[%c0_19, %c0_20] : memref<256x64xbf16, #tpu.memory_space<vmem>>, vector<256x64xbf16>
    %c0_21 = arith.constant 0 : index
    %c0_22 = arith.constant 0 : index
    %27 = vector.load %arg10[%c0_21, %c0_22] : memref<1x64xf32, #tpu.memory_space<vmem>>, vector<1x64xf32>
    %cst_23 = arith.constant dense<0.000000e+00> : vector<8x64xf32>
    %28 = tpu.matmul %25, %26, %cst_23 {dimension_numbers = #tpu.dot_dimension_numbers<[1], [0], [0], [1], [0, 0, 1, 1], [], []>} : vector<8x256xbf16>, vector<256x64xbf16>, vector<8x64xf32> -> vector<8x64xf32>
    %29 = vector.broadcast %27 : vector<1x64xf32> to vector<8x64xf32>
    %30 = arith.addf %28, %29 : vector<8x64xf32>
    %c0_24 = arith.constant 0 : index
    %c0_25 = arith.constant 0 : index
    %c0_26 = arith.constant 0 : index
    %31 = vector.load %arg11[%c0_24, %c0_25, %c0_26] : memref<1x8x64xf32, #tpu.memory_space<vmem>>, vector<1x8x64xf32>
    %32 = vector.shape_cast %31 : vector<1x8x64xf32> to vector<8x64xf32>
    %33 = vector.shape_cast %30 : vector<8x64xf32> to vector<1x8x64xf32>
    tpu.vector_store %arg11[%c0_24, %c0_25, %c0_26], %33 {strides = array<i32>} : memref<1x8x64xf32, #tpu.memory_space<vmem>>, vector<1x8x64xf32>,
    return
  }
  func.func @transform_0(%arg0: i32, %arg1: i32) -> (i32, i32, i32) {
    %c0_i32 = arith.constant 0 : i32
    %c0_i32_0 = arith.constant 0 : i32
    return %arg0, %arg1, %c0_i32 : i32, i32, i32
  }
  func.func @transform_1(%arg0: i32, %arg1: i32) -> (i32, i32, i32) {
    %c0_i32 = arith.constant 0 : i32
    %c0_i32_0 = arith.constant 0 : i32
    %c0_i32_1 = arith.constant 0 : i32
    return %arg0, %c0_i32, %c0_i32_0 : i32, i32, i32
  }
  func.func @transform_2(%arg0: i32, %arg1: i32) -> (i32, i32) {
    %c0_i32 = arith.constant 0 : i32
    %c0_i32_0 = arith.constant 0 : i32
    %c0_i32_1 = arith.constant 0 : i32
    return %c0_i32, %c0_i32_0 : i32, i32
  }
  func.func @transform_3(%arg0: i32, %arg1: i32) -> (i32, i32) {
    %c0_i32 = arith.constant 0 : i32
    %c0_i32_0 = arith.constant 0 : i32
    %c0_i32_1 = arith.constant 0 : i32
    return %c0_i32, %c0_i32_0 : i32, i32
  }
  func.func @transform_4(%arg0: i32, %arg1: i32) -> (i32, i32) {
    %c0_i32 = arith.constant 0 : i32
    %c0_i32_0 = arith.constant 0 : i32
    %c0_i32_1 = arith.constant 0 : i32
    return %c0_i32, %c0_i32_0 : i32, i32
  }
  func.func @transform_5(%arg0: i32, %arg1: i32) -> (i32, i32) {
    %c0_i32 = arith.constant 0 : i32
    %c0_i32_0 = arith.constant 0 : i32
    %c0_i32_1 = arith.constant 0 : i32
    return %c0_i32, %c0_i32_0 : i32, i32
  }
  func.func @transform_6(%arg0: i32, %arg1: i32) -> (i32, i32) {
    %c0_i32 = arith.constant 0 : i32
    %c0_i32_0 = arith.constant 0 : i32
    %c0_i32_1 = arith.constant 0 : i32
    return %c0_i32, %c0_i32_0 : i32, i32
  }
  func.func @transform_7(%arg0: i32, %arg1: i32) -> (i32, i32) {
    %c0_i32 = arith.constant 0 : i32
    %c0_i32_0 = arith.constant 0 : i32
    %c0_i32_1 = arith.constant 0 : i32
    return %c0_i32, %c0_i32_0 : i32, i32
  }
  func.func @transform_8(%arg0: i32, %arg1: i32) -> (i32, i32) {
    %c0_i32 = arith.constant 0 : i32
    %c0_i32_0 = arith.constant 0 : i32
    %c0_i32_1 = arith.constant 0 : i32
    return %c0_i32, %c0_i32_0 : i32, i32
  }
  func.func @transform_9(%arg0: i32, %arg1: i32) -> (i32, i32, i32) {
    %c0_i32 = arith.constant 0 : i32
    %c0_i32_0 = arith.constant 0 : i32
    return %arg0, %arg1, %c0_i32 : i32, i32, i32
  }
}

</mosaic_0001>

<llo_original>
// kernel: tpu_custom_call.1
$region0: #{tpu_custom_call.1}
  #allocation0 [shape = 'u32[]', space=smem, size = 0x4, offset = 0x4, fixed_abs, tag = 'smem constant byte address 0x4 - core index']
  #allocation1 [shape = 'u32[144,128]{1,0:T(1,128)}', space=vmem, size = 0x12000, scoped, tag = 'internal scratch']
  %s0 = inlined_call_operand.vmem [shape: f32[2,8,32], index: 0, kind: input, shape index: {}]
  %s1 = inlined_call_operand.vmem [shape: f32[2,1,32], index: 1, kind: input, shape index: {}]
  %s2 = inlined_call_operand.vmem [shape: bf16[32,128], index: 2, kind: input, shape index: {}]
  %s3 = inlined_call_operand.vmem [shape: bf16[32,128], index: 3, kind: input, shape index: {}]
  %s4 = inlined_call_operand.vmem [shape: f32[1,128], index: 4, kind: input, shape index: {}]
  %s5 = inlined_call_operand.vmem [shape: bf16[128,256], index: 5, kind: input, shape index: {}]
  %s6 = inlined_call_operand.vmem [shape: f32[1,256], index: 6, kind: input, shape index: {}]
  %s7 = inlined_call_operand.vmem [shape: bf16[256,64], index: 7, kind: input, shape index: {}]
  %s8 = inlined_call_operand.vmem [shape: f32[1,64], index: 8, kind: input, shape index: {}]
  %s9 = inlined_call_operand.hbm [shape: f32[2,8,64], index: 9, kind: output, shape index: {}]
  %s10 = sld [smem:[#allocation0]]
  $region69: #{tpu_custom_call.1} parent=0
    _
  %s12 = ssub.s32 1, %s10
  %s13 = scalar_select 0, %s12, %s10
  $region1: #{tpu_custom_call.1} parent=0
    #allocation2 [shape = 'u8[8192]{0}', space=vmem, size = 0x2000, scoped, tag = 'output window, operand 0']
    #allocation3 [shape = 's32[2]{0}', space=sflag, size = 0x8, scoped, tag = 'scoped memory for tpu_custom_call.1']
    %14 = vsyncpa [#allocation3], 0
    %s15 = scalar_lea.sflag [#allocation3], 1
    %16 = vsyncpa %s15, 0
    loop: start=0, step=1, limit=4
    $region2: #{tpu_custom_call.1} parent=1 // loop_pre_header
      _
    $region3: #{tpu_custom_call.1} parent=1 // loop_header
      %s18 = sphi 0, %s22
      %p19 = scmp.ge.s32.totalorder %s18, 4
      %s25 = sphi 0, %s37
      %s26 = sphi 0, %s33
      %s27 = sphi 0, %s25
      %s28 = sphi 0, %s26
      %s29 = sphi 0, %s27
      %s30 = sphi 0, %s28
      %s42 = sphi 0, %s44
      %s45 = sphi 0, %s42
      %s46 = sphi 0, %s45
      %s62 = sphi 0, %s46
      %s68 = sphi 0, %s70
      %s71 = sphi 0, %s68
      %s72 = sphi 0, %s71
      %s88 = sphi 0, %s72
      %s92 = sphi 0, %s92
      %s94 = sphi 0, %s92
      %s95 = sphi 0, %s94
      %s109 = sphi 0, %s95
      %s113 = sphi 0, %s113
      %s115 = sphi 0, %s113
      %s116 = sphi 0, %s115
      %s130 = sphi 0, %s116
      %s134 = sphi 0, %s134
      %s136 = sphi 0, %s134
      %s137 = sphi 0, %s136
      %s151 = sphi 0, %s137
      %s155 = sphi 0, %s155
      %s157 = sphi 0, %s155
      %s158 = sphi 0, %s157
      %s172 = sphi 0, %s158
      %s176 = sphi 0, %s176
      %s178 = sphi 0, %s176
      %s179 = sphi 0, %s178
      %s193 = sphi 0, %s179
      %s197 = sphi 0, %s197
      %s199 = sphi 0, %s197
      %s200 = sphi 0, %s199
      %s214 = sphi 0, %s200
      %s218 = sphi 0, %s218
      %s220 = sphi 0, %s218
      %s221 = sphi 0, %s220
      %s235 = sphi 0, %s221
      %s243 = sphi 0, %s245
      %s246 = sphi 0, %s243
      %s247 = sphi 0, %s246
      %s263 = sphi 0, %s247
    $region4: #{tpu_custom_call.1} parent=1 // loop_header_branch
      %21 = sbr.rel (%p19) target = $region8
    $region5: #{tpu_custom_call.1} parent=1 // loop_body
      %s23 = ssub.s32 %s18, 1
      %s24 = ssub.s32 %s18, 2
      %s31 = sadd.s32 1, %s26
      %p32 = scmp.ge.s32.totalorder %s31, 1
      %s33 = scalar_select %p32, 0, %s31
      %s34 = sadd.s32 1, %s25
      %s35 = scalar_select %p32, %s34, %s25
      %p36 = scmp.ge.s32.totalorder %s35, 2
      %s37 = scalar_select %p36, 0, %s35
      %s38 = ssub.s32 %s25, %s37
      %s39 = ssub.s32 %s26, %s33
      %s40 = sor.u32 %s38, %s39
      %p41 = scmp.eq.s32.totalorder %s40, 0
      %s43 = sadd.s32 %s42, 1
      %s44 = scalar_select %p41, %s42, %s43
      %p47 = pneg %p41
      %p48 = scmp.eq.s32.totalorder %s18, 1
      %p49 = por %p47, %p48
      %p50 = scmp.ne.s32.totalorder %s42, %s45
      %p51 = scmp.eq.s32.totalorder %s18, 0
      %p52 = por %p50, %p51
      %p53 = scmp.ne.s32.totalorder %s42, %s45
      %p54 = scmp.eq.s32.totalorder %s23, 1
      %p55 = por %p53, %p54
      %p56 = scmp.ne.s32.totalorder %s45, %s46
      %p57 = scmp.eq.s32.totalorder %s23, 0
      %p58 = por %p56, %p57
      %p59 = scmp.ne.s32.totalorder %s45, %s46
      %p60 = scmp.eq.s32.totalorder %s24, 1
      %p61 = por %p59, %p60
      %p63 = scmp.ne.s32.totalorder %s46, %s62
      %p64 = scmp.eq.s32.totalorder %s24, 0
      %p65 = por %p63, %p64
      %s66 = ssub.s32 %s25, %s37
      %p67 = scmp.eq.s32.totalorder %s66, 0
      %s69 = sadd.s32 %s68, 1
      %s70 = scalar_select %p67, %s68, %s69
      %p73 = pneg %p67
      %p74 = scmp.eq.s32.totalorder %s18, 1
      %p75 = por %p73, %p74
      %p76 = scmp.ne.s32.totalorder %s68, %s71
      %p77 = scmp.eq.s32.totalorder %s18, 0
      %p78 = por %p76, %p77
      %p79 = scmp.ne.s32.totalorder %s68, %s71
      %p80 = scmp.eq.s32.totalorder %s23, 1
      %p81 = por %p79, %p80
      %p82 = scmp.ne.s32.totalorder %s71, %s72
      %p83 = scmp.eq.s32.totalorder %s23, 0
      %p84 = por %p82, %p83
      %p85 = scmp.ne.s32.totalorder %s71, %s72
      %p86 = scmp.eq.s32.totalorder %s24, 1
      %p87 = por %p85, %p86
      %p89 = scmp.ne.s32.totalorder %s72, %s88
      %p90 = scmp.eq.s32.totalorder %s24, 0
      %p91 = por %p89, %p90
      %s93 = sadd.s32 %s92, 1
      %p96 = scmp.eq.s32.totalorder %s18, 1
      %p97 = scmp.ne.s32.totalorder %s92, %s94
      %p98 = scmp.eq.s32.totalorder %s18, 0
      %p99 = por %p97, %p98
      %p100 = scmp.ne.s32.totalorder %s92, %s94
      %p101 = scmp.eq.s32.totalorder %s23, 1
      %p102 = por %p100, %p101
      %p103 = scmp.ne.s32.totalorder %s94, %s95
      %p104 = scmp.eq.s32.totalorder %s23, 0
      %p105 = por %p103, %p104
      %p106 = scmp.ne.s32.totalorder %s94, %s95
      %p107 = scmp.eq.s32.totalorder %s24, 1
      %p108 = por %p106, %p107
      %p110 = scmp.ne.s32.totalorder %s95, %s109
      %p111 = scmp.eq.s32.totalorder %s24, 0
      %p112 = por %p110, %p111
      %s114 = sadd.s32 %s113, 1
      %p117 = scmp.eq.s32.totalorder %s18, 1
      %p118 = scmp.ne.s32.totalorder %s113, %s115
      %p119 = scmp.eq.s32.totalorder %s18, 0
      %p120 = por %p118, %p119
      %p121 = scmp.ne.s32.totalorder %s113, %s115
      %p122 = scmp.eq.s32.totalorder %s23, 1
      %p123 = por %p121, %p122
      %p124 = scmp.ne.s32.totalorder %s115, %s116
      %p125 = scmp.eq.s32.totalorder %s23, 0
      %p126 = por %p124, %p125
      %p127 = scmp.ne.s32.totalorder %s115, %s116
      %p128 = scmp.eq.s32.totalorder %s24, 1
      %p129 = por %p127, %p128
      %p131 = scmp.ne.s32.totalorder %s116, %s130
      %p132 = scmp.eq.s32.totalorder %s24, 0
      %p133 = por %p131, %p132
      %s135 = sadd.s32 %s134, 1
      %p138 = scmp.eq.s32.totalorder %s18, 1
      %p139 = scmp.ne.s32.totalorder %s134, %s136
      %p140 = scmp.eq.s32.totalorder %s18, 0
      %p141 = por %p139, %p140
      %p142 = scmp.ne.s32.totalorder %s134, %s136
      %p143 = scmp.eq.s32.totalorder %s23, 1
      %p144 = por %p142, %p143
      %p145 = scmp.ne.s32.totalorder %s136, %s137
      %p146 = scmp.eq.s32.totalorder %s23, 0
      %p147 = por %p145, %p146
      %p148 = scmp.ne.s32.totalorder %s136, %s137
      %p149 = scmp.eq.s32.totalorder %s24, 1
      %p150 = por %p148, %p149
      %p152 = scmp.ne.s32.totalorder %s137, %s151
      %p153 = scmp.eq.s32.totalorder %s24, 0
      %p154 = por %p152, %p153
      %s156 = sadd.s32 %s155, 1
      %p159 = scmp.eq.s32.totalorder %s18, 1
      %p160 = scmp.ne.s32.totalorder %s155, %s157
      %p161 = scmp.eq.s32.totalorder %s18, 0
      %p162 = por %p160, %p161
      %p163 = scmp.ne.s32.totalorder %s155, %s157
      %p164 = scmp.eq.s32.totalorder %s23, 1
      %p165 = por %p163, %p164
      %p166 = scmp.ne.s32.totalorder %s157, %s158
      %p167 = scmp.eq.s32.totalorder %s23, 0
      %p168 = por %p166, %p167
      %p169 = scmp.ne.s32.totalorder %s157, %s158
      %p170 = scmp.eq.s32.totalorder %s24, 1
      %p171 = por %p169, %p170
      %p173 = scmp.ne.s32.totalorder %s158, %s172
      %p174 = scmp.eq.s32.totalorder %s24, 0
      %p175 = por %p173, %p174
      %s177 = sadd.s32 %s176, 1
      %p180 = scmp.eq.s32.totalorder %s18, 1
      %p181 = scmp.ne.s32.totalorder %s176, %s178
      %p182 = scmp.eq.s32.totalorder %s18, 0
      %p183 = por %p181, %p182
      %p184 = scmp.ne.s32.totalorder %s176, %s178
      %p185 = scmp.eq.s32.totalorder %s23, 1
      %p186 = por %p184, %p185
      %p187 = scmp.ne.s32.totalorder %s178, %s179
      %p188 = scmp.eq.s32.totalorder %s23, 0
      %p189 = por %p187, %p188
      %p190 = scmp.ne.s32.totalorder %s178, %s179
      %p191 = scmp.eq.s32.totalorder %s24, 1
      %p192 = por %p190, %p191
      %p194 = scmp.ne.s32.totalorder %s179, %s193
      %p195 = scmp.eq.s32.totalorder %s24, 0
      %p196 = por %p194, %p195
      %s198 = sadd.s32 %s197, 1
      %p201 = scmp.eq.s32.totalorder %s18, 1
      %p202 = scmp.ne.s32.totalorder %s197, %s199
      %p203 = scmp.eq.s32.totalorder %s18, 0
      %p204 = por %p202, %p203
      %p205 = scmp.ne.s32.totalorder %s197, %s199
      %p206 = scmp.eq.s32.totalorder %s23, 1
      %p207 = por %p205, %p206
      %p208 = scmp.ne.s32.totalorder %s199, %s200
      %p209 = scmp.eq.s32.totalorder %s23, 0
      %p210 = por %p208, %p209
      %p211 = scmp.ne.s32.totalorder %s199, %s200
      %p212 = scmp.eq.s32.totalorder %s24, 1
      %p213 = por %p211, %p212
      %p215 = scmp.ne.s32.totalorder %s200, %s214
      %p216 = scmp.eq.s32.totalorder %s24, 0
      %p217 = por %p215, %p216
      %s219 = sadd.s32 %s218, 1
      %p222 = scmp.eq.s32.totalorder %s18, 1
      %p223 = scmp.ne.s32.totalorder %s218, %s220
      %p224 = scmp.eq.s32.totalorder %s18, 0
      %p225 = por %p223, %p224
      %p226 = scmp.ne.s32.totalorder %s218, %s220
      %p227 = scmp.eq.s32.totalorder %s23, 1
      %p228 = por %p226, %p227
      %p229 = scmp.ne.s32.totalorder %s220, %s221
      %p230 = scmp.eq.s32.totalorder %s23, 0
      %p231 = por %p229, %p230
      %p232 = scmp.ne.s32.totalorder %s220, %s221
      %p233 = scmp.eq.s32.totalorder %s24, 1
      %p234 = por %p232, %p233
      %p236 = scmp.ne.s32.totalorder %s221, %s235
      %p237 = scmp.eq.s32.totalorder %s24, 0
      %p238 = por %p236, %p237
      %s239 = ssub.s32 %s25, %s37
      %s240 = ssub.s32 %s26, %s33
      %s241 = sor.u32 %s239, %s240
      %p242 = scmp.eq.s32.totalorder %s241, 0
      %s244 = sadd.s32 %s243, 1
      %s245 = scalar_select %p242, %s243, %s244
      %p248 = pneg %p242
      %p249 = scmp.eq.s32.totalorder %s18, 1
      %p250 = por %p248, %p249
      %p251 = scmp.ne.s32.totalorder %s243, %s246
      %p252 = scmp.eq.s32.totalorder %s18, 0
      %p253 = por %p251, %p252
      %p254 = scmp.ne.s32.totalorder %s243, %s246
      %p255 = scmp.eq.s32.totalorder %s23, 1
      %p256 = por %p254, %p255
      %p257 = scmp.ne.s32.totalorder %s246, %s247
      %p258 = scmp.eq.s32.totalorder %s23, 0
      %p259 = por %p257, %p258
      %p260 = scmp.ne.s32.totalorder %s246, %s247
      %p261 = scmp.eq.s32.totalorder %s24, 1
      %p262 = por %p260, %p261
      %p264 = scmp.ne.s32.totalorder %s247, %s263
      %p265 = scmp.eq.s32.totalorder %s24, 0
      %p266 = por %p264, %p265
      %p267 = scmp.le.s32.totalorder 1, %s18
      %p268 = scmp.lt.s32.totalorder %s18, 3
      %p269 = pnand %p267, %p268
      %p270 = pneg %p269
      // Predicated region
      $region9: #{tpu_custom_call.1} parent=5 // pred_check
        _
      $region10: #{tpu_custom_call.1} parent=5 // pred_check_branch
        %272 = sbr.rel (%p269) target = $region12
      $region11: #{tpu_custom_call.1} parent=5 // pred_region
        %s273 = ssub.s32 %s18, 1
        // Predicated region
        $region13: #{tpu_custom_call.1} parent=11 // pred_check
          %p274 = pneg %p105
        $region14: #{tpu_custom_call.1} parent=11 // pred_check_branch
          %276 = sbr.rel (%p274) target = $region16
        $region15: #{tpu_custom_call.1} parent=11 // pred_region
          _
        $region16: #{tpu_custom_call.1} parent=11 // pred_fallthru
          _
        // Predicated region
        $region17: #{tpu_custom_call.1} parent=11 // pred_check
          %p277 = pneg %p126
        $region18: #{tpu_custom_call.1} parent=11 // pred_check_branch
          %279 = sbr.rel (%p277) target = $region20
        $region19: #{tpu_custom_call.1} parent=11 // pred_region
          _
        $region20: #{tpu_custom_call.1} parent=11 // pred_fallthru
          _
        // Predicated region
        $region21: #{tpu_custom_call.1} parent=11 // pred_check
          %p280 = pneg %p147
        $region22: #{tpu_custom_call.1} parent=11 // pred_check_branch
          %282 = sbr.rel (%p280) target = $region24
        $region23: #{tpu_custom_call.1} parent=11 // pred_region
          _
        $region24: #{tpu_custom_call.1} parent=11 // pred_fallthru
          _
        // Predicated region
        $region25: #{tpu_custom_call.1} parent=11 // pred_check
          %p283 = pneg %p168
        $region26: #{tpu_custom_call.1} parent=11 // pred_check_branch
          %285 = sbr.rel (%p283) target = $region28
        $region27: #{tpu_custom_call.1} parent=11 // pred_region
          _
        $region28: #{tpu_custom_call.1} parent=11 // pred_fallthru
          _
        // Predicated region
        $region29: #{tpu_custom_call.1} parent=11 // pred_check
          %p286 = pneg %p189
        $region30: #{tpu_custom_call.1} parent=11 // pred_check_branch
          %288 = sbr.rel (%p286) target = $region32
        $region31: #{tpu_custom_call.1} parent=11 // pred_region
          _
        $region32: #{tpu_custom_call.1} parent=11 // pred_fallthru
          _
        // Predicated region
        $region33: #{tpu_custom_call.1} parent=11 // pred_check
          %p289 = pneg %p210
        $region34: #{tpu_custom_call.1} parent=11 // pred_check_branch
          %291 = sbr.rel (%p289) target = $region36
        $region35: #{tpu_custom_call.1} parent=11 // pred_region
          _
        $region36: #{tpu_custom_call.1} parent=11 // pred_fallthru
          _
        // Predicated region
        $region37: #{tpu_custom_call.1} parent=11 // pred_check
          %p292 = pneg %p231
        $region38: #{tpu_custom_call.1} parent=11 // pred_check_branch
          %294 = sbr.rel (%p292) target = $region40
        $region39: #{tpu_custom_call.1} parent=11 // pred_region
          _
        $region40: #{tpu_custom_call.1} parent=11 // pred_fallthru
          _
      $region12: #{tpu_custom_call.1} parent=5 // pred_fallthru
        _
      %p295 = scmp.lt.s32.totalorder %s18, 2
      // Predicated region
      $region41: #{tpu_custom_call.1} parent=5 // pred_check
        %p296 = pneg %p295
      $region42: #{tpu_custom_call.1} parent=5 // pred_check_branch
        %298 = sbr.rel (%p296) target = $region44
      $region43: #{tpu_custom_call.1} parent=5 // pred_region
        // Predicated region
        $region45: #{tpu_custom_call.1} parent=43 // pred_check
          %p299 = pneg %p52
        $region46: #{tpu_custom_call.1} parent=43 // pred_check_branch
          %301 = sbr.rel (%p299) target = $region48
        $region47: #{tpu_custom_call.1} parent=43 // pred_region
          %p302 = scmp.lt.s32.totalorder %s25, 1
          %s303 = scalar_select %p302, %s25, 1
          %p304 = scmp.lt.s32.totalorder %s26, 0
          %s305 = scalar_select %p304, %s26, 0
          %s306 = sadd.s32 %s305, %s303
          %s307 = smul.addr %s306, 8
          %s308 = scalar_lea.vmem %s0, %s307
        $region48: #{tpu_custom_call.1} parent=43 // pred_fallthru
          _
        // Predicated region
        $region49: #{tpu_custom_call.1} parent=43 // pred_check
          %p309 = pneg %p78
        $region50: #{tpu_custom_call.1} parent=43 // pred_check_branch
          %311 = sbr.rel (%p309) target = $region52
        $region51: #{tpu_custom_call.1} parent=43 // pred_region
          %p312 = scmp.lt.s32.totalorder %s25, 1
          %s313 = scalar_select %p312, %s25, 1
          %s314 = scalar_lea.vmem %s1, %s313
        $region52: #{tpu_custom_call.1} parent=43 // pred_fallthru
          _
      $region44: #{tpu_custom_call.1} parent=5 // pred_fallthru
        _
      %p315 = scmp.le.s32.totalorder 1, %s18
      %p316 = scmp.lt.s32.totalorder %s18, 3
      %p317 = pnand %p315, %p316
      %p318 = pneg %p317
      // Predicated region
      $region53: #{tpu_custom_call.1} parent=5 // pred_check
        _
      $region54: #{tpu_custom_call.1} parent=5 // pred_check_branch
        %320 = sbr.rel (%p317) target = $region56
      $region55: #{tpu_custom_call.1} parent=5 // pred_region
        %s321 = ssub.s32 %s18, 1
        %p322 = scmp.lt.s32.totalorder %s27, 1
        %s323 = scalar_select %p322, %s27, 1
        %p324 = scmp.lt.s32.totalorder %s28, 0
        %s325 = scalar_select %p324, %s28, 0
        %s326 = sadd.s32 %s325, %s323
        %s327 = smul.addr %s326, 8
        %s328 = scalar_lea.vmem %s0, %s327
        %p329 = pneg %p58
        %p330 = pneg %p55
        %p331 = scmp.lt.s32.totalorder %s27, 1
        %s332 = scalar_select %p331, %s27, 1
        %s333 = scalar_lea.vmem %s1, %s332
        %p334 = pneg %p84
        %p335 = pneg %p81
        %p336 = pneg %p105
        %p337 = pneg %p102
        %p338 = pneg %p126
        %p339 = pneg %p123
        %p340 = pneg %p147
        %p341 = pneg %p144
        %p342 = pneg %p168
        %p343 = pneg %p165
        %p344 = pneg %p189
        %p345 = pneg %p186
        %p346 = pneg %p210
        %p347 = pneg %p207
        %p348 = pneg %p231
        %p349 = pneg %p228
        %p350 = pneg %p259
        %p351 = pneg %p256
        %s352 = sand.u32 %s246, 1
        %s353 = scalar_lea.sflag [#allocation3], %s352
        %s354 = sand.u32 %s246, 1
        %s355 = smul.addr %s354, 8
        %s356 = scalar_lea.vmem [#allocation2], %s355
        %p357 = scmp.lt.s32.totalorder %s27, 1
        %s358 = scalar_select %p357, %s27, 1
        %p359 = scmp.lt.s32.totalorder %s28, 0
        %s360 = scalar_select %p359, %s28, 0
        %s361 = sadd.s32 %s360, %s358
        %s362 = smul.addr %s361, 8
        %s363 = scalar_lea.vmem %s0, %s362
        %p364 = scmp.lt.s32.totalorder %s27, 1
        %s365 = scalar_select %p364, %s27, 1
        %s366 = scalar_lea.vmem %s1, %s365
        %v368 = vld [vmem:[%s363] sm:$0xff]
        %v369 = vpack.c.bf16 %v368, %v368
        %v370 = vld [vmem:[%s366] sm:$0x1]
        %v371 = vpack.c.bf16 %v370, %v370
        %v372 = vld [vmem:[%s2] sm:$0xf]
        %v373 = vld [vmem:[%s2 + $0x4] sm:$0xf]
        %v374 = vld [vmem:[%s2 + $0x8] sm:$0xf]
        %v375 = vld [vmem:[%s2 + $0xc] sm:$0xf]
        %v376 = vld [vmem:[%s3] sm:$0xf]
        %v377 = vld [vmem:[%s3 + $0x4] sm:$0xf]
        %v378 = vld [vmem:[%s3 + $0x8] sm:$0xf]
        %v379 = vld [vmem:[%s3 + $0xc] sm:$0xf]
        %v380 = vld [vmem:[%s4] sm:$0x1]
        %v385 = vunpack.c.l.b16 %v376
        %v386 = vunpack.c.l.b16 %v377
        %v387 = vunpack.c.l.b16 %v378
        %v388 = vunpack.c.l.b16 %v379
        %v389 = vpack.c.b16 %v386, %v385
        %v390 = vpack.c.b16 %v388, %v387
        %vm393 = vcmask 261120
        %v395 = vsel %vm393, %v371, 0
        %397 = vmatprep.subr.bf16.mxu0 0
        %398 = vmatpush1.bf16.msra.mxu0 0
        %399 = vmatprep.subr.bf16.mxu0 0
        %400 = vmatpush1.bf16.msra.mxu0 0
        %401 = vmatprep.subr.bf16.mxu0 0
        %402 = vmatpush1.bf16.msra.mxu0 0
        %403 = vmatprep.subr.bf16.mxu0 0
        %404 = vmatpush1.bf16.msra.mxu0 0
        %405 = vmatprep.subr.bf16.mxu0 0
        %406 = vmatpush1.bf16.msra.mxu0 0
        %407 = vmatprep.subr.bf16.mxu0 0
        %408 = vmatpush1.bf16.msra.mxu0 0
        %409 = vmatprep.subr.bf16.mxu0 0
        %410 = vmatpush1.bf16.msra.mxu0 %v390
        %411 = vmatprep.subr.bf16.mxu0 0
        %412 = vmatpush1.bf16.msra.mxu0 %v389
        %413 = vmatprep.subr.bf16.mxu0 0
        %414 = vmatpush2.bf16.msra.mxu0 0
        %415 = vmatprep.subr.bf16.mxu0 0
        %416 = vmatpush2.bf16.msra.mxu0 0
        %417 = vmatprep.subr.bf16.mxu0 0
        %418 = vmatpush2.bf16.msra.mxu0 0
        %419 = vmatprep.subr.bf16.mxu0 0
        %420 = vmatpush2.bf16.msra.mxu0 0
        %421 = vmatprep.subr.bf16.mxu0 0
        %422 = vmatpush2.bf16.msra.mxu0 0
        %423 = vmatprep.subr.bf16.mxu0 0
        %424 = vmatpush2.bf16.msra.mxu0 0
        %425 = vmatprep.subr.bf16.mxu0 0
        %426 = vmatpush2.bf16.msra.mxu0 0
        %427 = vmatprep.subr.bf16.mxu0 0
        %428 = vmatpush2.bf16.msra.mxu0 0
        %429 = vmatprep.mubr.bf16.mxu0 0
        %430 = vmatmul.mubr.bf16.gmra.mxu0 %v395
        %v431 = vpop.f32.mrf.mxu0
        %v432 = vadd.f32 0.0, %v431
        %v433 = vpop.f32.mrf.mxu0
        %v434 = vpop.f32.mrf.mxu0
        %v435 = vpop.f32.mrf.mxu0
        %436 = vdwg.mxu0
        %v437 = vlaneseq
        %v438 = vshrl.u32 %v437, 7
        %v439 = vsub.s32 0, %v438
        %v440 = vrot.slane %v432, %v439
        %v445 = vunpack.c.l.b16 %v372
        %v446 = vunpack.c.l.b16 %v373
        %v447 = vunpack.c.l.b16 %v374
        %v448 = vunpack.c.l.b16 %v375
        %v449 = vpack.c.b16 %v446, %v445
        %v450 = vpack.c.b16 %v448, %v447
        %v454 = vsel %vm393, %v369, 0
        %456 = vmatprep.subr.bf16.mxu0 0
        %457 = vmatpush1.bf16.msra.mxu0 0
        %458 = vmatprep.subr.bf16.mxu0 0
        %459 = vmatpush1.bf16.msra.mxu0 0
        %460 = vmatprep.subr.bf16.mxu0 0
        %461 = vmatpush1.bf16.msra.mxu0 0
        %462 = vmatprep.subr.bf16.mxu0 0
        %463 = vmatpush1.bf16.msra.mxu0 0
        %464 = vmatprep.subr.bf16.mxu0 0
        %465 = vmatpush1.bf16.msra.mxu0 0
        %466 = vmatprep.subr.bf16.mxu0 0
        %467 = vmatpush1.bf16.msra.mxu0 0
        %468 = vmatprep.subr.bf16.mxu0 0
        %469 = vmatpush1.bf16.msra.mxu0 %v450
        %470 = vmatprep.subr.bf16.mxu0 0
        %471 = vmatpush1.bf16.msra.mxu0 %v449
        %472 = vmatprep.subr.bf16.mxu0 0
        %473 = vmatpush2.bf16.msra.mxu0 0
        %474 = vmatprep.subr.bf16.mxu0 0
        %475 = vmatpush2.bf16.msra.mxu0 0
        %476 = vmatprep.subr.bf16.mxu0 0
        %477 = vmatpush2.bf16.msra.mxu0 0
        %478 = vmatprep.subr.bf16.mxu0 0
        %479 = vmatpush2.bf16.msra.mxu0 0
        %480 = vmatprep.subr.bf16.mxu0 0
        %481 = vmatpush2.bf16.msra.mxu0 0
        %482 = vmatprep.subr.bf16.mxu0 0
        %483 = vmatpush2.bf16.msra.mxu0 0
        %484 = vmatprep.subr.bf16.mxu0 0
        %485 = vmatpush2.bf16.msra.mxu0 0
        %486 = vmatprep.subr.bf16.mxu0 0
        %487 = vmatpush2.bf16.msra.mxu0 0
        %488 = vmatprep.mubr.bf16.mxu0 0
        %489 = vmatmul.mubr.bf16.gmra.mxu0 %v454
        %v490 = vpop.f32.mrf.mxu0
        %v491 = vadd.f32 %v440, %v490
        %v492 = vpop.f32.mrf.mxu0
        %v493 = vpop.f32.mrf.mxu0
        %v494 = vpop.f32.mrf.mxu0
        %495 = vdwg.mxu0
        %v497 = vlaneseq
        %v498 = vshrl.u32 %v497, 7
        %v499 = vsub.s32 0, %v498
        %v500 = vrot.slane %v380, %v499
        %v502 = vadd.f32 %v491, %v500
        %v503 = vmax.f32 %v502, 0.0
        %v504 = vpack.c.bf16 %v503, %v503
        %v505 = vld [vmem:[%s5] sm:$0xff]
        %v506 = vld [vmem:[%s5 + $0x8] sm:$0xff]
        %v507 = vld [vmem:[%s5 + $0x10] sm:$0xff]
        %v508 = vld [vmem:[%s5 + $0x18] sm:$0xff]
        %v509 = vld [vmem:[%s5 + $0x20] sm:$0xff]
        %v510 = vld [vmem:[%s5 + $0x28] sm:$0xff]
        %v511 = vld [vmem:[%s5 + $0x30] sm:$0xff]
        %v512 = vld [vmem:[%s5 + $0x38] sm:$0xff]
        %v513 = vld [vmem:[%s5 + $0x40] sm:$0xff]
        %v514 = vld [vmem:[%s5 + $0x48] sm:$0xff]
        %v515 = vld [vmem:[%s5 + $0x50] sm:$0xff]
        %v516 = vld [vmem:[%s5 + $0x58] sm:$0xff]
        %v517 = vld [vmem:[%s5 + $0x60] sm:$0xff]
        %v518 = vld [vmem:[%s5 + $0x68] sm:$0xff]
        %v519 = vld [vmem:[%s5 + $0x70] sm:$0xff]
        %v520 = vld [vmem:[%s5 + $0x78] sm:$0xff]
        %v521 = vld [vmem:[%s6] sm:$0x3]
        %v523 = vlaneseq
        %v524 = vshrl.u32 %v523, 7
        %v525 = vsub.s32 0, %v524
        %v526 = vrot.slane %v521, %v525
        %v527 = vlaneseq
        %v528 = vshrl.u32 %v527, 7
        %v529 = vsub.s32 1, %v528
        %v530 = vrot.slane %v521, %v529
        %v549 = vunpack.c.l.b16 %v505
        %v550 = vunpack.c.h.b16 %v505
        %v551 = vunpack.c.l.b16 %v506
        %v552 = vunpack.c.h.b16 %v506
        %v553 = vunpack.c.l.b16 %v507
        %v554 = vunpack.c.h.b16 %v507
        %v555 = vunpack.c.l.b16 %v508
        %v556 = vunpack.c.h.b16 %v508
        %v557 = vunpack.c.l.b16 %v509
        %v558 = vunpack.c.h.b16 %v509
        %v559 = vunpack.c.l.b16 %v510
        %v560 = vunpack.c.h.b16 %v510
        %v561 = vunpack.c.l.b16 %v511
        %v562 = vunpack.c.h.b16 %v511
        %v563 = vunpack.c.l.b16 %v512
        %v564 = vunpack.c.h.b16 %v512
        %v565 = vunpack.c.l.b16 %v513
        %v566 = vunpack.c.h.b16 %v513
        %v567 = vunpack.c.l.b16 %v514
        %v568 = vunpack.c.h.b16 %v514
        %v569 = vunpack.c.l.b16 %v515
        %v570 = vunpack.c.h.b16 %v515
        %v571 = vunpack.c.l.b16 %v516
        %v572 = vunpack.c.h.b16 %v516
        %v573 = vunpack.c.l.b16 %v517
        %v574 = vunpack.c.h.b16 %v517
        %v575 = vunpack.c.l.b16 %v518
        %v576 = vunpack.c.h.b16 %v518
        %v577 = vunpack.c.l.b16 %v519
        %v578 = vunpack.c.h.b16 %v519
        %v579 = vunpack.c.l.b16 %v520
        %v580 = vunpack.c.h.b16 %v520
        %v581 = vpack.c.b16 %v551, %v549
        %v582 = vpack.c.b16 %v552, %v550
        %v583 = vpack.c.b16 %v555, %v553
        %v584 = vpack.c.b16 %v556, %v554
        %v585 = vpack.c.b16 %v559, %v557
        %v586 = vpack.c.b16 %v560, %v558
        %v587 = vpack.c.b16 %v563, %v561
        %v588 = vpack.c.b16 %v564, %v562
        %v589 = vpack.c.b16 %v567, %v565
        %v590 = vpack.c.b16 %v568, %v566
        %v591 = vpack.c.b16 %v571, %v569
        %v592 = vpack.c.b16 %v572, %v570
        %v593 = vpack.c.b16 %v575, %v573
        %v594 = vpack.c.b16 %v576, %v574
        %v595 = vpack.c.b16 %v579, %v577
        %v596 = vpack.c.b16 %v580, %v578
        %613 = vmatprep.subr.bf16.mxu0 %v596
        %614 = vmatpush1.bf16.msra.mxu0 %v595
        %615 = vmatprep.subr.bf16.mxu0 %v594
        %616 = vmatpush1.bf16.msra.mxu0 %v593
        %617 = vmatprep.subr.bf16.mxu0 %v592
        %618 = vmatpush1.bf16.msra.mxu0 %v591
        %619 = vmatprep.subr.bf16.mxu0 %v590
        %620 = vmatpush1.bf16.msra.mxu0 %v589
        %621 = vmatprep.subr.bf16.mxu0 %v588
        %622 = vmatpush1.bf16.msra.mxu0 %v587
        %623 = vmatprep.subr.bf16.mxu0 %v586
        %624 = vmatpush1.bf16.msra.mxu0 %v585
        %625 = vmatprep.subr.bf16.mxu0 %v584
        %626 = vmatpush1.bf16.msra.mxu0 %v583
        %627 = vmatprep.subr.bf16.mxu0 %v582
        %628 = vmatpush1.bf16.msra.mxu0 %v581
        %629 = vmatprep.subr.bf16.mxu0 0
        %630 = vmatpush2.bf16.msra.mxu0 0
        %631 = vmatprep.subr.bf16.mxu0 0
        %632 = vmatpush2.bf16.msra.mxu0 0
        %633 = vmatprep.subr.bf16.mxu0 0
        %634 = vmatpush2.bf16.msra.mxu0 0
        %635 = vmatprep.subr.bf16.mxu0 0
        %636 = vmatpush2.bf16.msra.mxu0 0
        %637 = vmatprep.subr.bf16.mxu0 0
        %638 = vmatpush2.bf16.msra.mxu0 0
        %639 = vmatprep.subr.bf16.mxu0 0
        %640 = vmatpush2.bf16.msra.mxu0 0
        %641 = vmatprep.subr.bf16.mxu0 0
        %642 = vmatpush2.bf16.msra.mxu0 0
        %643 = vmatprep.subr.bf16.mxu0 0
        %644 = vmatpush2.bf16.msra.mxu0 0
        %645 = vmatprep.mubr.bf16.mxu0 0
        %646 = vmatmul.mubr.bf16.gmra.mxu0 %v504
        %v647 = vpop.f32.mrf.mxu0
        %v648 = vadd.f32 %v526, %v647
        %v649 = vpop.f32.mrf.mxu0
        %v650 = vadd.f32 %v530, %v649
        %v651 = vpop.f32.mrf.mxu0
        %v652 = vpop.f32.mrf.mxu0
        %653 = vdwg.mxu0
        %v654 = vmax.f32 %v648, 0.0
        %v655 = vmax.f32 %v650, 0.0
        %v656 = vpack.c.bf16 %v654, %v654
        %v657 = vpack.c.bf16 %v655, %v655
        %v658 = vld [vmem:[%s7] sm:$0xf]
        %v659 = vld [vmem:[%s7 + $0x4] sm:$0xf]
        %v660 = vld [vmem:[%s7 + $0x8] sm:$0xf]
        %v661 = vld [vmem:[%s7 + $0xc] sm:$0xf]
        %v662 = vld [vmem:[%s7 + $0x10] sm:$0xf]
        %v663 = vld [vmem:[%s7 + $0x14] sm:$0xf]
        %v664 = vld [vmem:[%s7 + $0x18] sm:$0xf]
        %v665 = vld [vmem:[%s7 + $0x1c] sm:$0xf]
        %v666 = vld [vmem:[%s7 + $0x20] sm:$0xf]
        %v667 = vld [vmem:[%s7 + $0x24] sm:$0xf]
        %v668 = vld [vmem:[%s7 + $0x28] sm:$0xf]
        %v669 = vld [vmem:[%s7 + $0x2c] sm:$0xf]
        %v670 = vld [vmem:[%s7 + $0x30] sm:$0xf]
        %v671 = vld [vmem:[%s7 + $0x34] sm:$0xf]
        %v672 = vld [vmem:[%s7 + $0x38] sm:$0xf]
        %v673 = vld [vmem:[%s7 + $0x3c] sm:$0xf]
        %v674 = vld [vmem:[%s7 + $0x40] sm:$0xf]
        %v675 = vld [vmem:[%s7 + $0x44] sm:$0xf]
        %v676 = vld [vmem:[%s7 + $0x48] sm:$0xf]
        %v677 = vld [vmem:[%s7 + $0x4c] sm:$0xf]
        %v678 = vld [vmem:[%s7 + $0x50] sm:$0xf]
        %v679 = vld [vmem:[%s7 + $0x54] sm:$0xf]
        %v680 = vld [vmem:[%s7 + $0x58] sm:$0xf]
        %v681 = vld [vmem:[%s7 + $0x5c] sm:$0xf]
        %v682 = vld [vmem:[%s7 + $0x60] sm:$0xf]
        %v683 = vld [vmem:[%s7 + $0x64] sm:$0xf]
        %v684 = vld [vmem:[%s7 + $0x68] sm:$0xf]
        %v685 = vld [vmem:[%s7 + $0x6c] sm:$0xf]
        %v686 = vld [vmem:[%s7 + $0x70] sm:$0xf]
        %v687 = vld [vmem:[%s7 + $0x74] sm:$0xf]
        %v688 = vld [vmem:[%s7 + $0x78] sm:$0xf]
        %v689 = vld [vmem:[%s7 + $0x7c] sm:$0xf]
        %v690 = vld [vmem:[%s8] sm:$0x1]
        %v692 = vlaneseq
        %v693 = vshrl.u32 %v692, 7
        %v694 = vsub.s32 0, %v693
        %v695 = vrot.slane %v690, %v694
        %v729 = vunpack.c.l.b16 %v658
        %v730 = vunpack.c.l.b16 %v659
        %v731 = vunpack.c.l.b16 %v660
        %v732 = vunpack.c.l.b16 %v661
        %v733 = vunpack.c.l.b16 %v662
        %v734 = vunpack.c.l.b16 %v663
        %v735 = vunpack.c.l.b16 %v664
        %v736 = vunpack.c.l.b16 %v665
        %v737 = vunpack.c.l.b16 %v666
        %v738 = vunpack.c.l.b16 %v667
        %v739 = vunpack.c.l.b16 %v668
        %v740 = vunpack.c.l.b16 %v669
        %v741 = vunpack.c.l.b16 %v670
        %v742 = vunpack.c.l.b16 %v671
        %v743 = vunpack.c.l.b16 %v672
        %v744 = vunpack.c.l.b16 %v673
        %v745 = vunpack.c.l.b16 %v674
        %v746 = vunpack.c.l.b16 %v675
        %v747 = vunpack.c.l.b16 %v676
        %v748 = vunpack.c.l.b16 %v677
        %v749 = vunpack.c.l.b16 %v678
        %v750 = vunpack.c.l.b16 %v679
        %v751 = vunpack.c.l.b16 %v680
        %v752 = vunpack.c.l.b16 %v681
        %v753 = vunpack.c.l.b16 %v682
        %v754 = vunpack.c.l.b16 %v683
        %v755 = vunpack.c.l.b16 %v684
        %v756 = vunpack.c.l.b16 %v685
        %v757 = vunpack.c.l.b16 %v686
        %v758 = vunpack.c.l.b16 %v687
        %v759 = vunpack.c.l.b16 %v688
        %v760 = vunpack.c.l.b16 %v689
        %v761 = vpack.c.b16 %v730, %v729
        %v762 = vpack.c.b16 %v732, %v731
        %v763 = vpack.c.b16 %v734, %v733
        %v764 = vpack.c.b16 %v736, %v735
        %v765 = vpack.c.b16 %v738, %v737
        %v766 = vpack.c.b16 %v740, %v739
        %v767 = vpack.c.b16 %v742, %v741
        %v768 = vpack.c.b16 %v744, %v743
        %v769 = vpack.c.b16 %v746, %v745
        %v770 = vpack.c.b16 %v748, %v747
        %v771 = vpack.c.b16 %v750, %v749
        %v772 = vpack.c.b16 %v752, %v751
        %v773 = vpack.c.b16 %v754, %v753
        %v774 = vpack.c.b16 %v756, %v755
        %v775 = vpack.c.b16 %v758, %v757
        %v776 = vpack.c.b16 %v760, %v759
        %793 = vmatprep.subr.bf16.mxu0 0
        %794 = vmatpush1.bf16.msra.mxu0 %v768
        %795 = vmatprep.subr.bf16.mxu0 0
        %796 = vmatpush1.bf16.msra.mxu0 %v767
        %797 = vmatprep.subr.bf16.mxu0 0
        %798 = vmatpush1.bf16.msra.mxu0 %v766
        %799 = vmatprep.subr.bf16.mxu0 0
        %800 = vmatpush1.bf16.msra.mxu0 %v765
        %801 = vmatprep.subr.bf16.mxu0 0
        %802 = vmatpush1.bf16.msra.mxu0 %v764
        %803 = vmatprep.subr.bf16.mxu0 0
        %804 = vmatpush1.bf16.msra.mxu0 %v763
        %805 = vmatprep.subr.bf16.mxu0 0
        %806 = vmatpush1.bf16.msra.mxu0 %v762
        %807 = vmatprep.subr.bf16.mxu0 0
        %808 = vmatpush1.bf16.msra.mxu0 %v761
        %809 = vmatprep.subr.bf16.mxu0 0
        %810 = vmatpush2.bf16.msra.mxu0 %v776
        %811 = vmatprep.subr.bf16.mxu0 0
        %812 = vmatpush2.bf16.msra.mxu0 %v775
        %813 = vmatprep.subr.bf16.mxu0 0
        %814 = vmatpush2.bf16.msra.mxu0 %v774
        %815 = vmatprep.subr.bf16.mxu0 0
        %816 = vmatpush2.bf16.msra.mxu0 %v773
        %817 = vmatprep.subr.bf16.mxu0 0
        %818 = vmatpush2.bf16.msra.mxu0 %v772
        %819 = vmatprep.subr.bf16.mxu0 0
        %820 = vmatpush2.bf16.msra.mxu0 %v771
        %821 = vmatprep.subr.bf16.mxu0 0
        %822 = vmatpush2.bf16.msra.mxu0 %v770
        %823 = vmatprep.subr.bf16.mxu0 0
        %824 = vmatpush2.bf16.msra.mxu0 %v769
        %825 = vmatprep.mubr.bf16.mxu0 %v657
        %826 = vmatmul.mubr.bf16.gmra.mxu0 %v656
        %v827 = vpop.f32.mrf.mxu0
        %v828 = vadd.f32 %v695, %v827
        %v829 = vpop.f32.mrf.mxu0
        %v830 = vpop.f32.mrf.mxu0
        %v831 = vpop.f32.mrf.mxu0
        %832 = vdwg.mxu0
        %vm833 = vcmask 523264
        %834 = vst.msk [vmem:[%s356] sm:$0xff] %vm833, %v828
        %s835 = sand.u32 %s246, 1
        %s836 = scalar_lea.sflag [#allocation3], %s835
        %s837 = sand.u32 %s246, 1
        %s838 = smul.addr %s837, 8
        %s839 = scalar_lea.vmem [#allocation2], %s838
        // Predicated region
        $region57: #{tpu_custom_call.1} parent=55 // pred_check
          %p840 = pneg %p256
        $region58: #{tpu_custom_call.1} parent=55 // pred_check_branch
          %842 = sbr.rel (%p840) target = $region60
        $region59: #{tpu_custom_call.1} parent=55 // pred_region
          %s844 = ssub.s32 128, 128
          %845 = vsyncadd %s836, %s844
          %s846 = sadd.s32 %s28, %s27
          %s847 = smul.addr %s846, 128
          %s848 = scalar_lea.hbm %s9, %s847
          %s850 = sshll.u32 %s839, 4
          %s851 = int_to_ptr.vmem [resolvable:$true] %s850
          %853 = dma.vmem_to_hbm [thread:$0]  %s851, 128, %s848, %s836
        $region60: #{tpu_custom_call.1} parent=55 // pred_fallthru
          _
      $region56: #{tpu_custom_call.1} parent=5 // pred_fallthru
        _
      %p854 = scmp.le.s32.totalorder 2, %s18
      // Predicated region
      $region61: #{tpu_custom_call.1} parent=5 // pred_check
        %p855 = pneg %p854
      $region62: #{tpu_custom_call.1} parent=5 // pred_check_branch
        %857 = sbr.rel (%p855) target = $region64
      $region63: #{tpu_custom_call.1} parent=5 // pred_region
        %s858 = ssub.s32 %s18, 2
        // Predicated region
        $region65: #{tpu_custom_call.1} parent=63 // pred_check
          %p859 = pneg %p262
        $region66: #{tpu_custom_call.1} parent=63 // pred_check_branch
          %861 = sbr.rel (%p859) target = $region68
        $region67: #{tpu_custom_call.1} parent=63 // pred_region
          %s862 = sand.u32 %s247, 1
          %s863 = scalar_lea.sflag [#allocation3], %s862
          %s864 = sand.u32 %s247, 1
          %s865 = smul.addr %s864, 8
          %s866 = scalar_lea.vmem [#allocation2], %s865
          %867 = dma.done %s863, 128
        $region68: #{tpu_custom_call.1} parent=63 // pred_fallthru
          _
      $region64: #{tpu_custom_call.1} parent=5 // pred_fallthru
        _
    $region6: #{tpu_custom_call.1} parent=1 // loop_footer
      %s22 = sadd.s32 1, %s18
    $region7: #{tpu_custom_call.1} parent=1 // loop_footer_branch
      %17 = sbr.rel target = $region3
    $region8: #{tpu_custom_call.1} parent=1 // loop_exit
      _
    %868 = vsyncpa [#allocation3], 1
    %s869 = scalar_lea.sflag [#allocation3], 1
    %870 = vsyncpa %s869, 1

</llo_original>
